<compile_context>
chip_gen: v6e
topology: v6e:2x2x1
jax: 0.10.0
libtpu: 0.0.40
codegen_flags: <defaults>
</compile_context>

<pallas_src>
import functools

import jax
import jax.numpy as jnp
from jax.experimental import pallas as pl
from jax.experimental.pallas import tpu as pltpu

LN_EPS = 1e-5


def _round_up(x, m):
    return ((x + m - 1) // m) * m


def _fusion_kernel(true_d, n_pad_lanes,
                   wts_ref,               # SMEM (3,)   normalized fusion weights
                   c_ref, s_ref, v_ref,   # VMEM (TM, D_in) feature tiles (input dtype)
                   w1_ref, b1_ref,        # VMEM (D_in, D_pad) compute dtype, (1, D_pad) f32
                   gamma_ref, beta_ref,   # VMEM (1, D_pad) f32 (zero-padded lanes)
                   w2_ref, b2_ref,        # VMEM (D_pad, D) compute dtype, (1, D) f32
                   out_ref):              # VMEM (TM, D) out dtype
    f32 = jnp.float32
    inv_true_d = 1.0 / true_d

    w_c = wts_ref[0]
    w_s = wts_ref[1]
    w_v = wts_ref[2]

    cd = w1_ref.dtype  # MXU compute dtype
    if c_ref.dtype == cd:
        # Features already arrive in the compute dtype: weighted sum directly
        # (no tile-wide converts at all).
        fused = (w_c.astype(cd) * c_ref[...]
                 + w_s.astype(cd) * s_ref[...]
                 + w_v.astype(cd) * v_ref[...])
    else:
        # Features are f32 in HBM: sum in f32 and cast ONCE for the MXU.
        # (Casting the three inputs first would be more converts and less
        # accurate; the wrapper never pre-casts the big tensors.)
        fused32 = (w_c * c_ref[...].astype(f32)
                   + w_s * s_ref[...].astype(f32)
                   + w_v * v_ref[...].astype(f32))
        fused = fused32.astype(cd)

    # Linear 1 on the MXU with f32 accumulation.
    h = jnp.dot(fused, w1_ref[...], preferred_element_type=f32) + b1_ref[...]

    # LayerNorm over the true hidden dim (two-pass centered form - no
    # cancellation).  Padded lanes of h are exactly zero (zero-padded W1
    # columns / b1), so their centered contribution is (-mean)^2 per padded
    # lane and is removed analytically with a cheap (TM,1) correction.
    mean = jnp.sum(h, axis=-1, keepdims=True) * inv_true_d
    h_c = h - mean                                   # needed for normalization anyway
    ss = jnp.sum(h_c * h_c, axis=-1, keepdims=True)
    if n_pad_lanes:
        ss = ss - n_pad_lanes * (mean * mean)
    var = jnp.maximum(ss * inv_true_d, 0.0)
    inv_std = jax.lax.rsqrt(var + LN_EPS)            # (TM, 1) row scalars (cheap)
    # Affine epilogue at the tile-wide minimum (centering already done above);
    # note: folding gamma into the per-row scale would itself require a
    # (TM, D_pad) outer product, so it does not reduce full-tile VPU work.
    h_ln = (h_c * inv_std) * gamma_ref[...] + beta_ref[...]
    h_relu = jnp.maximum(h_ln, 0.0)                  # padded lanes stay exactly 0

    # Linear 2 on the MXU + bias; single cast on store (out dtype may be bf16).
    out = jnp.dot(h_relu.astype(cd), w2_ref[...], preferred_element_type=f32) + b2_ref[...]
    out_ref[...] = out.astype(out_ref.dtype)


def graph_fusion_forward(cooc_feat, spatial_feat, visual_feat, params, *,
                         block_rows=None, compute_dtype=jnp.float32, out_dtype=None):
    """Pallas forward of GraphFusionModule.

    Features: [..., hidden_dim]; leading dims are flattened to N rows.
    compute_dtype: dtype fed to the MXU (bf16 on v6e/v7x halves weight VMEM and
    MXU operand width); accumulation and LayerNorm stay in f32.
    out_dtype: defaults to compute_dtype (bf16 output halves output HBM traffic).
    """
    orig_shape = cooc_feat.shape
    D = orig_shape[-1]
    f32 = jnp.float32
    compute_dtype = jnp.dtype(compute_dtype)
    out_dtype = compute_dtype if out_dtype is None else jnp.dtype(out_dtype)

    x_c = cooc_feat.reshape(-1, D)
    x_s = spatial_feat.reshape(-1, D)
    x_v = visual_feat.reshape(-1, D)
    N = x_c.shape[0]

    D_pad = _round_up(D, 128)
    aligned = (D_pad == D)

    # Lane-aligned D (the module default 256): features go to the kernel
    # untouched - zero extra wrapper passes over N*D data.  Unaligned D falls
    # back to one wrapper pad pass (keeps the matmul contraction lane-aligned).
    # TODO(synk): move the unaligned-D pad fully in-kernel once lane-masked
    # matmul contraction is exercised on all generations.
    if aligned:
        D_in = D
    else:
        D_in = D_pad
        pad = ((0, 0), (0, D_pad - D))
        x_c = jnp.pad(x_c, pad)
        x_s = jnp.pad(x_s, pad)
        x_v = jnp.pad(x_v, pad)

    def as_row(v, width, dtype):
        v = v.reshape(1, -1).astype(dtype)
        return jnp.pad(v, ((0, 0), (0, width - v.shape[1])))

    # Weights in compute dtype.  Always pad via jnp.pad (zero fill) so the pad
    # region is guaranteed-zero and LayerNorm statistics stay exact.
    w1 = jnp.pad(params["w1"].astype(compute_dtype),
                 ((0, D_in - D), (0, D_pad - D)))
    w2 = jnp.pad(params["w2"].astype(compute_dtype),
                 ((0, D_pad - D), (0, 0)))
    b1 = as_row(params["b1"], D_pad, f32)
    gamma = as_row(params["ln_gamma"], D_pad, f32)
    beta = as_row(params["ln_beta"], D_pad, f32)
    b2 = as_row(params["b2"], D, f32)

    # Normalized fusion weights precomputed outside the kernel and scalar-
    # prefetched into SMEM (removes divides / serial dep from every grid step).
    inv_c = 1.0 / params["cooccurrence_uncertainty"].astype(f32)
    inv_s = 1.0 / params["spatial_uncertainty"].astype(f32)
    inv_v = 1.0 / params["visual_uncertainty"].astype(f32)
    inv_total = 1.0 / (inv_c + inv_s + inv_v)
    wts = jnp.stack([inv_c * inv_total, inv_s * inv_total, inv_v * inv_total]).astype(f32)

    # --- budget-first N-tile derivation (generation aware via VMEM capacity) ---
    try:
        vmem_cap = int(getattr(pltpu.get_tpu_info(), "vmem_capacity_bytes", 0))
    except Exception:
        vmem_cap = 0
    if vmem_cap <= 0:
        vmem_cap = 128 << 20
    budget = max(32 << 20, min((vmem_cap * 3) // 4, 96 << 20))

    in_isz = jnp.dtype(x_c.dtype).itemsize
    out_isz = out_dtype.itemsize
    w_isz = compute_dtype.itemsize
    # Weights/biases are double-buffered by the pipeline even with a constant
    # index_map (single-buffering them via pipeline_mode only matters for very
    # large D); account for that plus headroom for compiler internals.
    fixed = 2 * ((D_in * D_pad + D_pad * D) * w_isz + (3 * D_pad + D) * 4) + (2 << 20)
    # Per-row footprint: double-buffered 3 input tiles + output tile, plus
    # ~7 tile-sized f32 temporaries inside the kernel body.
    per_row = 2 * 3 * D_in * in_isz + 2 * D * out_isz + 7 * D_pad * 4

    if block_rows is None:
        tm = (budget - fixed) // per_row
        tm = max(8, min(4096, (tm // 8) * 8))
    else:
        tm = max(8, _round_up(block_rows, 8))
    tm = min(tm, _round_up(N, 8))
    # Keep >=4 grid steps on moderate N so v7x's two TensorCores each get >=2
    # blocks (megacore sharding + DMA/compute overlap stay active).
    if block_rows is None and N >= 32:
        tm = min(tm, max(8, (N // 32) * 8))
    num_blocks = pl.cdiv(N, tm)
    vmem_limit = int(min(max(fixed + per_row * tm, 32 << 20), budget))

    feat_spec = pl.BlockSpec((tm, D_in), lambda i, wts_s: (i, 0))
    out_spec = pl.BlockSpec((tm, D), lambda i, wts_s: (i, 0))
    w1_spec = pl.BlockSpec((D_in, D_pad), lambda i, wts_s: (0, 0))   # VMEM-resident
    w2_spec = pl.BlockSpec((D_pad, D), lambda i, wts_s: (0, 0))      # VMEM-resident
    rowp_spec = pl.BlockSpec((1, D_pad), lambda i, wts_s: (0, 0))
    row_spec = pl.BlockSpec((1, D), lambda i, wts_s: (0, 0))

    grid_spec = pltpu.PrefetchScalarGridSpec(
        num_scalar_prefetch=1,              # normalized fusion weights -> SMEM
        grid=(num_blocks,),
        in_specs=[feat_spec, feat_spec, feat_spec,   # cooc, spatial, visual tiles
                  w1_spec, rowp_spec,                # W1, b1
                  rowp_spec, rowp_spec,              # gamma, beta
                  w2_spec, row_spec],                # W2, b2
        out_specs=out_spec,
    )

    out = pl.pallas_call(
        functools.partial(_fusion_kernel, D, D_pad - D),
        out_shape=jax.ShapeDtypeStruct((N, D), out_dtype),
        grid_spec=grid_spec,
        compiler_params=pltpu.CompilerParams(
            dimension_semantics=("parallel",),       # rows independent
            vmem_limit_bytes=vmem_limit,
        ),
    )(wts, x_c, x_s, x_v, w1, b1, gamma, beta, w2, b2)

    return out.reshape(orig_shape)


def init_params(key, hidden_dim):
    """Deterministic synthetic parameter init (shapes match the PyTorch module)."""
    k1, k2, k3, k4 = jax.random.split(key, 4)
    D = hidden_dim
    bound = 1.0 / float(D) ** 0.5
    return {
        "cooccurrence_uncertainty": jnp.float32(1.0),
        "spatial_uncertainty": jnp.float32(1.0),
        "visual_uncertainty": jnp.float32(1.0),
        # nn.Linear stores weight as [out, in] and computes x @ W.T; we store the
        # already-transposed [in, out] matrix so the kernel does x @ W.
        "w1": jax.random.uniform(k1, (D, D), jnp.float32, -bound, bound),
        "b1": jax.random.uniform(k2, (1, D), jnp.float32, -bound, bound),
        "ln_gamma": jnp.ones((1, D), jnp.float32),
        "ln_beta": jnp.zeros((1, D), jnp.float32),
        "w2": jax.random.uniform(k3, (D, D), jnp.float32, -bound, bound),
        "b2": jax.random.uniform(k4, (1, D), jnp.float32, -bound, bound),
    }


def reference_forward(cooc, spatial, visual, params):
    """Pure-JAX reference matching the PyTorch module (high-precision matmuls)."""
    inv_c = 1.0 / params["cooccurrence_uncertainty"]
    inv_s = 1.0 / params["spatial_uncertainty"]
    inv_v = 1.0 / params["visual_uncertainty"]
    total = inv_c + inv_s + inv_v
    fused = (inv_c / total) * cooc + (inv_s / total) * spatial + (inv_v / total) * visual
    h = jnp.dot(fused, params["w1"], precision="highest") + params["b1"]
    mean = h.mean(-1, keepdims=True)
    var = ((h - mean) ** 2).mean(-1, keepdims=True)
    h = (h - mean) * jax.lax.rsqrt(var + LN_EPS) * params["ln_gamma"] + params["ln_beta"]
    h = jnp.maximum(h, 0.0)
    return jnp.dot(h, params["w2"], precision="highest") + params["b2"]


if __name__ == "__main__":
    key = jax.random.PRNGKey(0)
    kp, kc, ks, kv = jax.random.split(key, 4)

    def run_case(hidden_dim, batch, num_classes, compute_dtype, atol, rtol):
        params = init_params(kp, hidden_dim)
        # Non-trivial uncertainties so the weighting actually matters.
        params["cooccurrence_uncertainty"] = jnp.float32(0.8)
        params["spatial_uncertainty"] = jnp.float32(1.3)
        params["visual_uncertainty"] = jnp.float32(2.0)

        shape = (batch, num_classes, hidden_dim)   # [..., hidden_dim]; flattened inside
        cooc = jax.random.normal(kc, shape, jnp.float32)
        spatial = jax.random.normal(ks, shape, jnp.float32)
        visual = jax.random.normal(kv, shape, jnp.float32)

        out = graph_fusion_forward(cooc, spatial, visual, params,
                                   compute_dtype=compute_dtype)
        out = jax.block_until_ready(out)
        ref = reference_forward(cooc, spatial, visual, params)
        assert out.shape == shape
        assert out.dtype == jnp.dtype(compute_dtype)
        assert jnp.allclose(out.astype(jnp.float32), ref, atol=atol, rtol=rtol), (
            f"mismatch vs reference (hidden={hidden_dim}, dtype={compute_dtype})")

    # Module default hidden_dim=256: lane-aligned, zero wrapper passes over features.
    run_case(hidden_dim=256, batch=2, num_classes=8,
             compute_dtype=jnp.float32, atol=1e-2, rtol=1e-2)
    # Non-128-aligned hidden dim exercises the lane-padding + exact-LN-correction path.
    run_case(hidden_dim=32, batch=2, num_classes=8,
             compute_dtype=jnp.float32, atol=1e-2, rtol=1e-2)
    # bf16 compute: bf16 weights/MXU operands/output, f32 accumulation + LayerNorm.
    run_case(hidden_dim=256, batch=2, num_classes=8,
             compute_dtype=jnp.bfloat16, atol=1.5e-1, rtol=1.5e-1)

    print("KERNEL_OK")
</pallas_src>

<mosaic_0001>
module attributes {stable_mosaic.version = 11 : i64} {
  func.func @_fusion_kernel(%arg0: i32, %arg1: memref<3xf32, #tpu.memory_space<smem>>, %arg2: memref<16x256xf32, #tpu.memory_space<vmem>>, %arg3: memref<16x256xf32, #tpu.memory_space<vmem>>, %arg4: memref<16x256xf32, #tpu.memory_space<vmem>>, %arg5: memref<256x256xf32, #tpu.memory_space<vmem>>, %arg6: memref<1x256xf32, #tpu.memory_space<vmem>>, %arg7: memref<1x256xf32, #tpu.memory_space<vmem>>, %arg8: memref<1x256xf32, #tpu.memory_space<vmem>>, %arg9: memref<256x256xf32, #tpu.memory_space<vmem>>, %arg10: memref<1x256xf32, #tpu.memory_space<vmem>>, %arg11: memref<16x256xf32, #tpu.memory_space<vmem>>) attributes {dimension_semantics = [#tpu.dimension_semantics<parallel>], iteration_bounds = array<i64: 1>, scalar_prefetch = 1 : i64, scratch_operands = 0 : i64, tpu.core_type = #tpu.core_type<tc>, window_params = [{transform_indices = @transform_0, window_bounds = array<i64: 16, 256>}, {transform_indices = @transform_1, window_bounds = array<i64: 16, 256>}, {transform_indices = @transform_2, window_bounds = array<i64: 16, 256>}, {pipeline_mode = #tpu.pipeline_mode<synchronous>, transform_indices = @transform_3, window_bounds = array<i64: 256, 256>}, {pipeline_mode = #tpu.pipeline_mode<synchronous>, transform_indices = @transform_4, window_bounds = array<i64: 1, 256>}, {pipeline_mode = #tpu.pipeline_mode<synchronous>, transform_indices = @transform_5, window_bounds = array<i64: 1, 256>}, {pipeline_mode = #tpu.pipeline_mode<synchronous>, transform_indices = @transform_6, window_bounds = array<i64: 1, 256>}, {pipeline_mode = #tpu.pipeline_mode<synchronous>, transform_indices = @transform_7, window_bounds = array<i64: 256, 256>}, {pipeline_mode = #tpu.pipeline_mode<synchronous>, transform_indices = @transform_8, window_bounds = array<i64: 1, 256>}, {transform_indices = @transform_9, window_bounds = array<i64: 16, 256>}]} {
    %c0 = arith.constant 0 : index
    %0 = memref.load %arg1[%c0] : memref<3xf32, #tpu.memory_space<smem>>
    %c1 = arith.constant 1 : index
    %1 = memref.load %arg1[%c1] : memref<3xf32, #tpu.memory_space<smem>>
    %c2 = arith.constant 2 : index
    %2 = memref.load %arg1[%c2] : memref<3xf32, #tpu.memory_space<smem>>
    %c0_0 = arith.constant 0 : index
    %c0_1 = arith.constant 0 : index
    %3 = vector.load %arg2[%c0_0, %c0_1] : memref<16x256xf32, #tpu.memory_space<vmem>>, vector<16x256xf32>
    %4 = vector.broadcast %0 : f32 to vector<16x256xf32>
    %5 = arith.mulf %4, %3 : vector<16x256xf32>
    %c0_2 = arith.constant 0 : index
    %c0_3 = arith.constant 0 : index
    %6 = vector.load %arg3[%c0_2, %c0_3] : memref<16x256xf32, #tpu.memory_space<vmem>>, vector<16x256xf32>
    %7 = vector.broadcast %1 : f32 to vector<16x256xf32>
    %8 = arith.mulf %7, %6 : vector<16x256xf32>
    %9 = arith.addf %5, %8 : vector<16x256xf32>
    %c0_4 = arith.constant 0 : index
    %c0_5 = arith.constant 0 : index
    %10 = vector.load %arg4[%c0_4, %c0_5] : memref<16x256xf32, #tpu.memory_space<vmem>>, vector<16x256xf32>
    %11 = vector.broadcast %2 : f32 to vector<16x256xf32>
    %12 = arith.mulf %11, %10 : vector<16x256xf32>
    %13 = arith.addf %9, %12 : vector<16x256xf32>
    %c0_6 = arith.constant 0 : index
    %c0_7 = arith.constant 0 : index
    %14 = vector.load %arg5[%c0_6, %c0_7] : memref<256x256xf32, #tpu.memory_space<vmem>>, vector<256x256xf32>
    %cst = arith.constant dense<0.000000e+00> : vector<16x256xf32>
    %15 = tpu.matmul %13, %14, %cst {dimension_numbers = #tpu.dot_dimension_numbers<[1], [0], [0], [1], [0, 0, 1, 1], [], []>} : vector<16x256xf32>, vector<256x256xf32>, vector<16x256xf32> -> vector<16x256xf32>
    %c0_8 = arith.constant 0 : index
    %c0_9 = arith.constant 0 : index
    %16 = vector.load %arg6[%c0_8, %c0_9] : memref<1x256xf32, #tpu.memory_space<vmem>>, vector<1x256xf32>
    %17 = vector.broadcast %16 : vector<1x256xf32> to vector<16x256xf32>
    %18 = arith.addf %15, %17 : vector<16x256xf32>
    %cst_10 = arith.constant dense<0.000000e+00> : vector<16xf32>
    %19 = vector.multi_reduction <add>, %18, %cst_10 [1] : vector<16x256xf32> to vector<16xf32>
    %20 = vector.shape_cast %19 : vector<16xf32> to vector<16x1xf32>
    %cst_11 = arith.constant 3.906250e-03 : f32
    %21 = vector.broadcast %cst_11 : f32 to vector<16x1xf32>
    %22 = arith.mulf %20, %21 : vector<16x1xf32>
    %23 = vector.broadcast %22 : vector<16x1xf32> to vector<16x256xf32>
    %24 = arith.subf %18, %23 : vector<16x256xf32>
    %25 = arith.mulf %24, %24 : vector<16x256xf32>
    %cst_12 = arith.constant dense<0.000000e+00> : vector<16xf32>
    %26 = vector.multi_reduction <add>, %25, %cst_12 [1] : vector<16x256xf32> to vector<16xf32>
    %27 = vector.shape_cast %26 : vector<16xf32> to vector<16x1xf32>
    %cst_13 = arith.constant 3.906250e-03 : f32
    %28 = vector.broadcast %cst_13 : f32 to vector<16x1xf32>
    %29 = arith.mulf %27, %28 : vector<16x1xf32>
    %cst_14 = arith.constant 0.000000e+00 : f32
    %30 = vector.broadcast %cst_14 : f32 to vector<16x1xf32>
    %31 = arith.maximumf %29, %30 : vector<16x1xf32>
    %cst_15 = arith.constant 9.99999974E-6 : f32
    %32 = vector.broadcast %cst_15 : f32 to vector<16x1xf32>
    %33 = arith.addf %31, %32 : vector<16x1xf32>
    %34 = math.rsqrt %33 : vector<16x1xf32>
    %35 = vector.broadcast %34 : vector<16x1xf32> to vector<16x256xf32>
    %36 = arith.mulf %24, %35 : vector<16x256xf32>
    %c0_16 = arith.constant 0 : index
    %c0_17 = arith.constant 0 : index
    %37 = vector.load %arg7[%c0_16, %c0_17] : memref<1x256xf32, #tpu.memory_space<vmem>>, vector<1x256xf32>
    %38 = vector.broadcast %37 : vector<1x256xf32> to vector<16x256xf32>
    %39 = arith.mulf %36, %38 : vector<16x256xf32>
    %c0_18 = arith.constant 0 : index
    %c0_19 = arith.constant 0 : index
    %40 = vector.load %arg8[%c0_18, %c0_19] : memref<1x256xf32, #tpu.memory_space<vmem>>, vector<1x256xf32>
    %41 = vector.broadcast %40 : vector<1x256xf32> to vector<16x256xf32>
    %42 = arith.addf %39, %41 : vector<16x256xf32>
    %cst_20 = arith.constant 0.000000e+00 : f32
    %43 = vector.broadcast %cst_20 : f32 to vector<16x256xf32>
    %44 = arith.maximumf %42, %43 : vector<16x256xf32>
    %c0_21 = arith.constant 0 : index
    %c0_22 = arith.constant 0 : index
    %45 = vector.load %arg9[%c0_21, %c0_22] : memref<256x256xf32, #tpu.memory_space<vmem>>, vector<256x256xf32>
    %cst_23 = arith.constant dense<0.000000e+00> : vector<16x256xf32>
    %46 = tpu.matmul %44, %45, %cst_23 {dimension_numbers = #tpu.dot_dimension_numbers<[1], [0], [0], [1], [0, 0, 1, 1], [], []>} : vector<16x256xf32>, vector<256x256xf32>, vector<16x256xf32> -> vector<16x256xf32>
    %c0_24 = arith.constant 0 : index
    %c0_25 = arith.constant 0 : index
    %47 = vector.load %arg10[%c0_24, %c0_25] : memref<1x256xf32, #tpu.memory_space<vmem>>, vector<1x256xf32>
    %48 = vector.broadcast %47 : vector<1x256xf32> to vector<16x256xf32>
    %49 = arith.addf %46, %48 : vector<16x256xf32>
    %c0_26 = arith.constant 0 : index
    %c0_27 = arith.constant 0 : index
    %50 = vector.load %arg11[%c0_26, %c0_27] : memref<16x256xf32, #tpu.memory_space<vmem>>, vector<16x256xf32>
    tpu.vector_store %arg11[%c0_26, %c0_27], %49 {strides = array<i32>} : memref<16x256xf32, #tpu.memory_space<vmem>>, vector<16x256xf32>,
    return
  }
  func.func @transform_0(%arg0: i32, %arg1: memref<3xf32, #tpu.memory_space<smem>>) -> (i32, i32) {
    %c0_i32 = arith.constant 0 : i32
    %c0_i32_0 = arith.constant 0 : i32
    return %arg0, %c0_i32 : i32, i32
  }
  func.func @transform_1(%arg0: i32, %arg1: memref<3xf32, #tpu.memory_space<smem>>) -> (i32, i32) {
    %c0_i32 = arith.constant 0 : i32
    %c0_i32_0 = arith.constant 0 : i32
    return %arg0, %c0_i32 : i32, i32
  }
  func.func @transform_2(%arg0: i32, %arg1: memref<3xf32, #tpu.memory_space<smem>>) -> (i32, i32) {
    %c0_i32 = arith.constant 0 : i32
    %c0_i32_0 = arith.constant 0 : i32
    return %arg0, %c0_i32 : i32, i32
  }
  func.func @transform_3(%arg0: i32, %arg1: memref<3xf32, #tpu.memory_space<smem>>) -> (i32, i32) {
    %c0_i32 = arith.constant 0 : i32
    %c0_i32_0 = arith.constant 0 : i32
    %c0_i32_1 = arith.constant 0 : i32
    return %c0_i32, %c0_i32_0 : i32, i32
  }
  func.func @transform_4(%arg0: i32, %arg1: memref<3xf32, #tpu.memory_space<smem>>) -> (i32, i32) {
    %c0_i32 = arith.constant 0 : i32
    %c0_i32_0 = arith.constant 0 : i32
    %c0_i32_1 = arith.constant 0 : i32
    return %c0_i32, %c0_i32_0 : i32, i32
  }
  func.func @transform_5(%arg0: i32, %arg1: memref<3xf32, #tpu.memory_space<smem>>) -> (i32, i32) {
    %c0_i32 = arith.constant 0 : i32
    %c0_i32_0 = arith.constant 0 : i32
    %c0_i32_1 = arith.constant 0 : i32
    return %c0_i32, %c0_i32_0 : i32, i32
  }
  func.func @transform_6(%arg0: i32, %arg1: memref<3xf32, #tpu.memory_space<smem>>) -> (i32, i32) {
    %c0_i32 = arith.constant 0 : i32
    %c0_i32_0 = arith.constant 0 : i32
    %c0_i32_1 = arith.constant 0 : i32
    return %c0_i32, %c0_i32_0 : i32, i32
  }
  func.func @transform_7(%arg0: i32, %arg1: memref<3xf32, #tpu.memory_space<smem>>) -> (i32, i32) {
    %c0_i32 = arith.constant 0 : i32
    %c0_i32_0 = arith.constant 0 : i32
    %c0_i32_1 = arith.constant 0 : i32
    return %c0_i32, %c0_i32_0 : i32, i32
  }
  func.func @transform_8(%arg0: i32, %arg1: memref<3xf32, #tpu.memory_space<smem>>) -> (i32, i32) {
    %c0_i32 = arith.constant 0 : i32
    %c0_i32_0 = arith.constant 0 : i32
    %c0_i32_1 = arith.constant 0 : i32
    return %c0_i32, %c0_i32_0 : i32, i32
  }
  func.func @transform_9(%arg0: i32, %arg1: memref<3xf32, #tpu.memory_space<smem>>) -> (i32, i32) {
    %c0_i32 = arith.constant 0 : i32
    %c0_i32_0 = arith.constant 0 : i32
    return %arg0, %c0_i32 : i32, i32
  }
}

</mosaic_0001>

<llo_original>
// kernel: tpu_custom_call.1
$region0: #{tpu_custom_call.1}
  #allocation0 [shape = 'u32[]', space=smem, size = 0x4, offset = 0x4, fixed_abs, tag = 'smem constant byte address 0x4 - core index']
  #allocation1 [shape = 'u32[144,128]{1,0:T(1,128)}', space=vmem, size = 0x12000, scoped, tag = 'internal scratch']
  #allocation2 [shape = 's32[1]{0}', space=sflag, size = 0x4, scoped, tag = 'scoped memory for tpu_custom_call.1']
  #allocation3 [shape = 'u8[512]{0}', space=smem, size = 0x200, scoped, tag = 'prefetched SMEM operand 0']
  %s0 = inlined_call_operand.hbm [shape: f32[3], index: 0, kind: input, shape index: {}]
  %s1 = inlined_call_operand.hbm [shape: f32[16,256], index: 1, kind: input, shape index: {}]
  %s2 = inlined_call_operand.hbm [shape: f32[16,256], index: 2, kind: input, shape index: {}]
  %s3 = inlined_call_operand.hbm [shape: f32[16,256], index: 3, kind: input, shape index: {}]
  %s4 = inlined_call_operand.hbm [shape: f32[256,256], index: 4, kind: input, shape index: {}]
  %s5 = inlined_call_operand.vmem [shape: f32[1,256], index: 5, kind: input, shape index: {}]
  %s6 = inlined_call_operand.vmem [shape: f32[1,256], index: 6, kind: input, shape index: {}]
  %s7 = inlined_call_operand.vmem [shape: f32[1,256], index: 7, kind: input, shape index: {}]
  %s8 = inlined_call_operand.hbm [shape: f32[256,256], index: 8, kind: input, shape index: {}]
  %s9 = inlined_call_operand.vmem [shape: f32[1,256], index: 9, kind: input, shape index: {}]
  %s10 = inlined_call_operand.hbm [shape: f32[16,256], index: 10, kind: output, shape index: {}]
  %s11 = sld [smem:[#allocation0]]
  $region66: #{tpu_custom_call.1} parent=0
    _
  %s13 = ssub.s32 1, %s11
  %s14 = scalar_select 0, %s13, %s11
  %16 = dma.hbm_to_smem %s0, 16, [#allocation3], [#allocation2]
  %17 = dma.done [#allocation2], 16
  %18 = sfence
  $region1: #{tpu_custom_call.1} parent=0
    #allocation4 [shape = 'u8[16384]{0}', space=vmem, size = 0x4000, scoped, tag = 'input window, operand 1, single buffered']
    #allocation5 [shape = 's32[1]{0}', space=sflag, size = 0x4, scoped, tag = 'scoped memory for tpu_custom_call.1']
    #allocation6 [shape = 's32[1]{0}', space=sflag, size = 0x4, scoped, tag = 'scoped memory for tpu_custom_call.1']
    #allocation7 [shape = 'u8[16384]{0}', space=vmem, size = 0x4000, scoped, tag = 'input window, operand 2, single buffered']
    #allocation8 [shape = 's32[1]{0}', space=sflag, size = 0x4, scoped, tag = 'scoped memory for tpu_custom_call.1']
    #allocation9 [shape = 'u8[16384]{0}', space=vmem, size = 0x4000, scoped, tag = 'input window, operand 3, single buffered']
    #allocation10 [shape = 'u8[262144]{0}', space=vmem, size = 0x40000, scoped, tag = 'input window, operand 4, single buffered']
    #allocation11 [shape = 's32[1]{0}', space=sflag, size = 0x4, scoped, tag = 'scoped memory for tpu_custom_call.1']
    #allocation12 [shape = 'u8[262144]{0}', space=vmem, size = 0x40000, scoped, tag = 'input window, operand 8, single buffered']
    #allocation13 [shape = 'u8[16384]{0}', space=vmem, size = 0x4000, scoped, tag = 'output window, operand 0, single buffered']
    %19 = vsyncpa [#allocation5], 0
    %20 = vsyncpa [#allocation8], 0
    %21 = vsyncpa [#allocation11], 0
    %22 = vsyncpa [#allocation6], 0
    // Predicated region
    $region2: #{tpu_custom_call.1} parent=1 // pred_check
      _
    $region3: #{tpu_custom_call.1} parent=1 // pred_check_branch
      %24 = sbr.rel (0) target = $region5
    $region4: #{tpu_custom_call.1} parent=1 // pred_region
      %s26 = ssub.s32 512, 512
      %27 = vsyncadd [#allocation5], %s26
      %s28 = sshll.u32 [#allocation4], 4
      %s29 = int_to_ptr.vmem [resolvable:$true] %s28
      %34 = dma.hbm_to_vmem [thread:$0]  %s1, 512, %s29, [#allocation5], 256, 256, 16
    $region5: #{tpu_custom_call.1} parent=1 // pred_fallthru
      _
    // Predicated region
    $region6: #{tpu_custom_call.1} parent=1 // pred_check
      _
    $region7: #{tpu_custom_call.1} parent=1 // pred_check_branch
      %36 = sbr.rel (0) target = $region9
    $region8: #{tpu_custom_call.1} parent=1 // pred_region
      %s38 = ssub.s32 512, 512
      %39 = vsyncadd [#allocation8], %s38
      %s40 = sshll.u32 [#allocation7], 4
      %s41 = int_to_ptr.vmem [resolvable:$true] %s40
      %46 = dma.hbm_to_vmem [thread:$0]  %s2, 512, %s41, [#allocation8], 256, 256, 16
    $region9: #{tpu_custom_call.1} parent=1 // pred_fallthru
      _
    // Predicated region
    $region10: #{tpu_custom_call.1} parent=1 // pred_check
      _
    $region11: #{tpu_custom_call.1} parent=1 // pred_check_branch
      %48 = sbr.rel (0) target = $region13
    $region12: #{tpu_custom_call.1} parent=1 // pred_region
      %s50 = ssub.s32 512, 512
      %51 = vsyncadd [#allocation8], %s50
      %s52 = sshll.u32 [#allocation9], 4
      %s53 = int_to_ptr.vmem [resolvable:$true] %s52
      %58 = dma.hbm_to_vmem [thread:$0]  %s3, 512, %s53, [#allocation8], 256, 256, 16
    $region13: #{tpu_custom_call.1} parent=1 // pred_fallthru
      _
    // Predicated region
    $region14: #{tpu_custom_call.1} parent=1 // pred_check
      _
    $region15: #{tpu_custom_call.1} parent=1 // pred_check_branch
      %60 = sbr.rel (0) target = $region17
    $region16: #{tpu_custom_call.1} parent=1 // pred_region
      %s62 = ssub.s32 8192, 8192
      %63 = vsyncadd [#allocation11], %s62
      %s64 = sshll.u32 [#allocation10], 4
      %s65 = int_to_ptr.vmem [resolvable:$true] %s64
      %70 = dma.hbm_to_vmem [thread:$0]  %s4, 8192, %s65, [#allocation11], 256, 256, 16
    $region17: #{tpu_custom_call.1} parent=1 // pred_fallthru
      _
    // Predicated region
    $region18: #{tpu_custom_call.1} parent=1 // pred_check
      _
    $region19: #{tpu_custom_call.1} parent=1 // pred_check_branch
      %72 = sbr.rel (0) target = $region21
    $region20: #{tpu_custom_call.1} parent=1 // pred_region
      _
    $region21: #{tpu_custom_call.1} parent=1 // pred_fallthru
      _
    // Predicated region
    $region22: #{tpu_custom_call.1} parent=1 // pred_check
      _
    $region23: #{tpu_custom_call.1} parent=1 // pred_check_branch
      %74 = sbr.rel (0) target = $region25
    $region24: #{tpu_custom_call.1} parent=1 // pred_region
      _
    $region25: #{tpu_custom_call.1} parent=1 // pred_fallthru
      _
    // Predicated region
    $region26: #{tpu_custom_call.1} parent=1 // pred_check
      _
    $region27: #{tpu_custom_call.1} parent=1 // pred_check_branch
      %76 = sbr.rel (0) target = $region29
    $region28: #{tpu_custom_call.1} parent=1 // pred_region
      _
    $region29: #{tpu_custom_call.1} parent=1 // pred_fallthru
      _
    // Predicated region
    $region30: #{tpu_custom_call.1} parent=1 // pred_check
      _
    $region31: #{tpu_custom_call.1} parent=1 // pred_check_branch
      %78 = sbr.rel (0) target = $region33
    $region32: #{tpu_custom_call.1} parent=1 // pred_region
      %s80 = ssub.s32 8192, 8192
      %81 = vsyncadd [#allocation11], %s80
      %s82 = sshll.u32 [#allocation12], 4
      %s83 = int_to_ptr.vmem [resolvable:$true] %s82
      %88 = dma.hbm_to_vmem [thread:$0]  %s8, 8192, %s83, [#allocation11], 256, 256, 16
    $region33: #{tpu_custom_call.1} parent=1 // pred_fallthru
      _
    // Predicated region
    $region34: #{tpu_custom_call.1} parent=1 // pred_check
      _
    $region35: #{tpu_custom_call.1} parent=1 // pred_check_branch
      %90 = sbr.rel (0) target = $region37
    $region36: #{tpu_custom_call.1} parent=1 // pred_region
      _
    $region37: #{tpu_custom_call.1} parent=1 // pred_fallthru
      _
    // Predicated region
    $region38: #{tpu_custom_call.1} parent=1 // pred_check
      _
    $region39: #{tpu_custom_call.1} parent=1 // pred_check_branch
      %92 = sbr.rel (0) target = $region41
    $region40: #{tpu_custom_call.1} parent=1 // pred_region
      %93 = dma.done [#allocation5], 512
    $region41: #{tpu_custom_call.1} parent=1 // pred_fallthru
      _
    // Predicated region
    $region42: #{tpu_custom_call.1} parent=1 // pred_check
      _
    $region43: #{tpu_custom_call.1} parent=1 // pred_check_branch
      %95 = sbr.rel (0) target = $region45
    $region44: #{tpu_custom_call.1} parent=1 // pred_region
      %96 = dma.done [#allocation8], 512
    $region45: #{tpu_custom_call.1} parent=1 // pred_fallthru
      _
    // Predicated region
    $region46: #{tpu_custom_call.1} parent=1 // pred_check
      _
    $region47: #{tpu_custom_call.1} parent=1 // pred_check_branch
      %98 = sbr.rel (0) target = $region49
    $region48: #{tpu_custom_call.1} parent=1 // pred_region
      %99 = dma.done [#allocation8], 512
    $region49: #{tpu_custom_call.1} parent=1 // pred_fallthru
      _
    // Predicated region
    $region50: #{tpu_custom_call.1} parent=1 // pred_check
      _
    $region51: #{tpu_custom_call.1} parent=1 // pred_check_branch
      %101 = sbr.rel (0) target = $region53
    $region52: #{tpu_custom_call.1} parent=1 // pred_region
      %102 = dma.done [#allocation11], 8192
    $region53: #{tpu_custom_call.1} parent=1 // pred_fallthru
      _
    // Predicated region
    $region54: #{tpu_custom_call.1} parent=1 // pred_check
      _
    $region55: #{tpu_custom_call.1} parent=1 // pred_check_branch
      %104 = sbr.rel (0) target = $region57
    $region56: #{tpu_custom_call.1} parent=1 // pred_region
      %105 = dma.done [#allocation11], 8192
    $region57: #{tpu_custom_call.1} parent=1 // pred_fallthru
      _
    %s106 = sld [smem:[#allocation3]]
    %s107 = sld [smem:[#allocation3 + $0x1]]
    %s108 = sld [smem:[#allocation3 + $0x2]]
    %v109 = vld [vmem:[#allocation4] sm:$0xff]
    %v110 = vld [vmem:[#allocation4 + $0x8] sm:$0xff]
    %v111 = vld [vmem:[#allocation4 + $0x10] sm:$0xff]
    %v112 = vld [vmem:[#allocation4 + $0x18] sm:$0xff]
    %v113 = vstv %s106
    %v114 = vmul.f32 %v113, %v109
    %v115 = vmul.f32 %v113, %v110
    %v116 = vmul.f32 %v113, %v111
    %v117 = vmul.f32 %v113, %v112
    %v118 = vld [vmem:[#allocation7] sm:$0xff]
    %v119 = vld [vmem:[#allocation7 + $0x8] sm:$0xff]
    %v120 = vld [vmem:[#allocation7 + $0x10] sm:$0xff]
    %v121 = vld [vmem:[#allocation7 + $0x18] sm:$0xff]
    %v122 = vstv %s107
    %v123 = vmul.f32 %v122, %v118
    %v124 = vmul.f32 %v122, %v119
    %v125 = vmul.f32 %v122, %v120
    %v126 = vmul.f32 %v122, %v121
    %v127 = vadd.f32 %v114, %v123
    %v128 = vadd.f32 %v115, %v124
    %v129 = vadd.f32 %v116, %v125
    %v130 = vadd.f32 %v117, %v126
    %v131 = vld [vmem:[#allocation9] sm:$0xff]
    %v132 = vld [vmem:[#allocation9 + $0x8] sm:$0xff]
    %v133 = vld [vmem:[#allocation9 + $0x10] sm:$0xff]
    %v134 = vld [vmem:[#allocation9 + $0x18] sm:$0xff]
    %v135 = vstv %s108
    %v136 = vmul.f32 %v135, %v131
    %v137 = vmul.f32 %v135, %v132
    %v138 = vmul.f32 %v135, %v133
    %v139 = vmul.f32 %v135, %v134
    %v140 = vadd.f32 %v127, %v136
    %v141 = vadd.f32 %v128, %v137
    %v142 = vadd.f32 %v129, %v138
    %v143 = vadd.f32 %v130, %v139
    %v144 = vld [vmem:[#allocation10] sm:$0xff]
    %v145 = vld [vmem:[#allocation10 + $0x8] sm:$0xff]
    %v146 = vld [vmem:[#allocation10 + $0x10] sm:$0xff]
    %v147 = vld [vmem:[#allocation10 + $0x18] sm:$0xff]
    %v148 = vld [vmem:[#allocation10 + $0x20] sm:$0xff]
    %v149 = vld [vmem:[#allocation10 + $0x28] sm:$0xff]
    %v150 = vld [vmem:[#allocation10 + $0x30] sm:$0xff]
    %v151 = vld [vmem:[#allocation10 + $0x38] sm:$0xff]
    %v152 = vld [vmem:[#allocation10 + $0x40] sm:$0xff]
    %v153 = vld [vmem:[#allocation10 + $0x48] sm:$0xff]
    %v154 = vld [vmem:[#allocation10 + $0x50] sm:$0xff]
    %v155 = vld [vmem:[#allocation10 + $0x58] sm:$0xff]
    %v156 = vld [vmem:[#allocation10 + $0x60] sm:$0xff]
    %v157 = vld [vmem:[#allocation10 + $0x68] sm:$0xff]
    %v158 = vld [vmem:[#allocation10 + $0x70] sm:$0xff]
    %v159 = vld [vmem:[#allocation10 + $0x78] sm:$0xff]
    %v160 = vld [vmem:[#allocation10 + $0x80] sm:$0xff]
    %v161 = vld [vmem:[#allocation10 + $0x88] sm:$0xff]
    %v162 = vld [vmem:[#allocation10 + $0x90] sm:$0xff]
    %v163 = vld [vmem:[#allocation10 + $0x98] sm:$0xff]
    %v164 = vld [vmem:[#allocation10 + $0xa0] sm:$0xff]
    %v165 = vld [vmem:[#allocation10 + $0xa8] sm:$0xff]
    %v166 = vld [vmem:[#allocation10 + $0xb0] sm:$0xff]
    %v167 = vld [vmem:[#allocation10 + $0xb8] sm:$0xff]
    %v168 = vld [vmem:[#allocation10 + $0xc0] sm:$0xff]
    %v169 = vld [vmem:[#allocation10 + $0xc8] sm:$0xff]
    %v170 = vld [vmem:[#allocation10 + $0xd0] sm:$0xff]
    %v171 = vld [vmem:[#allocation10 + $0xd8] sm:$0xff]
    %v172 = vld [vmem:[#allocation10 + $0xe0] sm:$0xff]
    %v173 = vld [vmem:[#allocation10 + $0xe8] sm:$0xff]
    %v174 = vld [vmem:[#allocation10 + $0xf0] sm:$0xff]
    %v175 = vld [vmem:[#allocation10 + $0xf8] sm:$0xff]
    %v176 = vld [vmem:[#allocation10 + $0x100] sm:$0xff]
    %v177 = vld [vmem:[#allocation10 + $0x108] sm:$0xff]
    %v178 = vld [vmem:[#allocation10 + $0x110] sm:$0xff]
    %v179 = vld [vmem:[#allocation10 + $0x118] sm:$0xff]
    %v180 = vld [vmem:[#allocation10 + $0x120] sm:$0xff]
    %v181 = vld [vmem:[#allocation10 + $0x128] sm:$0xff]
    %v182 = vld [vmem:[#allocation10 + $0x130] sm:$0xff]
    %v183 = vld [vmem:[#allocation10 + $0x138] sm:$0xff]
    %v184 = vld [vmem:[#allocation10 + $0x140] sm:$0xff]
    %v185 = vld [vmem:[#allocation10 + $0x148] sm:$0xff]
    %v186 = vld [vmem:[#allocation10 + $0x150] sm:$0xff]
    %v187 = vld [vmem:[#allocation10 + $0x158] sm:$0xff]
    %v188 = vld [vmem:[#allocation10 + $0x160] sm:$0xff]
    %v189 = vld [vmem:[#allocation10 + $0x168] sm:$0xff]
    %v190 = vld [vmem:[#allocation10 + $0x170] sm:$0xff]
    %v191 = vld [vmem:[#allocation10 + $0x178] sm:$0xff]
    %v192 = vld [vmem:[#allocation10 + $0x180] sm:$0xff]
    %v193 = vld [vmem:[#allocation10 + $0x188] sm:$0xff]
    %v194 = vld [vmem:[#allocation10 + $0x190] sm:$0xff]
    %v195 = vld [vmem:[#allocation10 + $0x198] sm:$0xff]
    %v196 = vld [vmem:[#allocation10 + $0x1a0] sm:$0xff]
    %v197 = vld [vmem:[#allocation10 + $0x1a8] sm:$0xff]
    %v198 = vld [vmem:[#allocation10 + $0x1b0] sm:$0xff]
    %v199 = vld [vmem:[#allocation10 + $0x1b8] sm:$0xff]
    %v200 = vld [vmem:[#allocation10 + $0x1c0] sm:$0xff]
    %v201 = vld [vmem:[#allocation10 + $0x1c8] sm:$0xff]
    %v202 = vld [vmem:[#allocation10 + $0x1d0] sm:$0xff]
    %v203 = vld [vmem:[#allocation10 + $0x1d8] sm:$0xff]
    %v204 = vld [vmem:[#allocation10 + $0x1e0] sm:$0xff]
    %v205 = vld [vmem:[#allocation10 + $0x1e8] sm:$0xff]
    %v206 = vld [vmem:[#allocation10 + $0x1f0] sm:$0xff]
    %v207 = vld [vmem:[#allocation10 + $0x1f8] sm:$0xff]
    %v208 = vld [vmem:[%s5] sm:$0x3]
    %v210 = vlaneseq
    %v211 = vshrl.u32 %v210, 7
    %v212 = vsub.s32 0, %v211
    %v213 = vrot.slane %v208, %v212
    %v214 = vlaneseq
    %v215 = vshrl.u32 %v214, 7
    %v216 = vsub.s32 1, %v215
    %v217 = vrot.slane %v208, %v216
    %220 = vmatprep.subr.mxu0 %v175
    %221 = vmatpush1.msra.mxu0 %v174
    %222 = vmatprep.subr.mxu0 %v173
    %223 = vmatpush1.msra.mxu0 %v172
    %224 = vmatprep.subr.mxu0 %v171
    %225 = vmatpush1.msra.mxu0 %v170
    %226 = vmatprep.subr.mxu0 %v169
    %227 = vmatpush1.msra.mxu0 %v168
    %228 = vmatprep.subr.mxu0 %v167
    %229 = vmatpush1.msra.mxu0 %v166
    %230 = vmatprep.subr.mxu0 %v165
    %231 = vmatpush1.msra.mxu0 %v164
    %232 = vmatprep.subr.mxu0 %v163
    %233 = vmatpush1.msra.mxu0 %v162
    %234 = vmatprep.subr.mxu0 %v161
    %235 = vmatpush1.msra.mxu0 %v160
    %236 = vmatprep.subr.mxu0 %v159
    %237 = vmatpush1.msra.mxu0 %v158
    %238 = vmatprep.subr.mxu0 %v157
    %239 = vmatpush1.msra.mxu0 %v156
    %240 = vmatprep.subr.mxu0 %v155
    %241 = vmatpush1.msra.mxu0 %v154
    %242 = vmatprep.subr.mxu0 %v153
    %243 = vmatpush1.msra.mxu0 %v152
    %244 = vmatprep.subr.mxu0 %v151
    %245 = vmatpush1.msra.mxu0 %v150
    %246 = vmatprep.subr.mxu0 %v149
    %247 = vmatpush1.msra.mxu0 %v148
    %248 = vmatprep.subr.mxu0 %v147
    %249 = vmatpush1.msra.mxu0 %v146
    %250 = vmatprep.subr.mxu0 %v145
    %251 = vmatpush1.msra.mxu0 %v144
    %252 = vmatprep.subr.mxu0 %v207
    %253 = vmatpush2.msra.mxu0 %v206
    %254 = vmatprep.subr.mxu0 %v205
    %255 = vmatpush2.msra.mxu0 %v204
    %256 = vmatprep.subr.mxu0 %v203
    %257 = vmatpush2.msra.mxu0 %v202
    %258 = vmatprep.subr.mxu0 %v201
    %259 = vmatpush2.msra.mxu0 %v200
    %260 = vmatprep.subr.mxu0 %v199
    %261 = vmatpush2.msra.mxu0 %v198
    %262 = vmatprep.subr.mxu0 %v197
    %263 = vmatpush2.msra.mxu0 %v196
    %264 = vmatprep.subr.mxu0 %v195
    %265 = vmatpush2.msra.mxu0 %v194
    %266 = vmatprep.subr.mxu0 %v193
    %267 = vmatpush2.msra.mxu0 %v192
    %268 = vmatprep.subr.mxu0 %v191
    %269 = vmatpush2.msra.mxu0 %v190
    %270 = vmatprep.subr.mxu0 %v189
    %271 = vmatpush2.msra.mxu0 %v188
    %272 = vmatprep.subr.mxu0 %v187
    %273 = vmatpush2.msra.mxu0 %v186
    %274 = vmatprep.subr.mxu0 %v185
    %275 = vmatpush2.msra.mxu0 %v184
    %276 = vmatprep.subr.mxu0 %v183
    %277 = vmatpush2.msra.mxu0 %v182
    %278 = vmatprep.subr.mxu0 %v181
    %279 = vmatpush2.msra.mxu0 %v180
    %280 = vmatprep.subr.mxu0 %v179
    %281 = vmatpush2.msra.mxu0 %v178
    %282 = vmatprep.subr.mxu0 %v177
    %283 = vmatpush2.msra.mxu0 %v176
    %284 = vmatprep.mubr.f32.mxu0 %v141
    %285 = vmatmul.mubr.f32.gmra.mxu0 %v140
    %v286 = vpop.f32.mrf.mxu0
    %v287 = vadd.f32 %v213, %v286
    %v288 = vpop.f32.mrf.mxu0
    %v289 = vadd.f32 %v217, %v288
    %290 = vmatprep.mubr.f32.mxu0 %v143
    %291 = vmatmul.mubr.f32.gmra.mxu0 %v142
    %v292 = vpop.f32.mrf.mxu0
    %v293 = vadd.f32 %v213, %v292
    %v294 = vpop.f32.mrf.mxu0
    %v295 = vadd.f32 %v217, %v294
    %296 = vdwg.mxu0
    %v297 = vadd.f32 %v287, %v289
    %298 = vadd.xlane.f32.xlu0 %v297
    %v299 = vpop.xlane.xlu0 %298
    %v300 = vadd.f32 %v293, %v295
    %301 = vadd.xlane.f32.xlu0 %v300
    %v302 = vpop.xlane.xlu0 %301
    %v303 = vmul.f32 %v299, 0.00390625
    %v304 = vmul.f32 %v302, 0.00390625
    %v305 = vsub.f32 %v287, %v303
    %v306 = vsub.f32 %v289, %v303
    %v307 = vsub.f32 %v293, %v304
    %v308 = vsub.f32 %v295, %v304
    %v309 = vmul.f32 %v305, %v305
    %v310 = vmul.f32 %v306, %v306
    %v311 = vmul.f32 %v307, %v307
    %v312 = vmul.f32 %v308, %v308
    %v313 = vadd.f32 %v309, %v310
    %314 = vadd.xlane.f32.xlu0 %v313
    %v315 = vpop.xlane.xlu0 %314
    %v316 = vadd.f32 %v311, %v312
    %317 = vadd.xlane.f32.xlu0 %v316
    %v318 = vpop.xlane.xlu0 %317
    %v319 = vmul.f32 %v315, 0.00390625
    %v320 = vmul.f32 %v318, 0.00390625
    %v321 = vmax.f32 %v319, 0.0
    %v322 = vmax.f32 %v320, 0.0
    %v323 = vadd.f32 %v321, 1e-05
    %v324 = vadd.f32 %v322, 1e-05
    %v325 = vrsqrt.pop %v323
    %v326 = vrsqrt.pop %v324
    %v327 = vmul.f32 %v305, %v325
    %v328 = vmul.f32 %v306, %v325
    %v329 = vmul.f32 %v307, %v326
    %v330 = vmul.f32 %v308, %v326
    %v331 = vld [vmem:[%s6] sm:$0x3]
    %v333 = vlaneseq
    %v334 = vshrl.u32 %v333, 7
    %v335 = vsub.s32 0, %v334
    %v336 = vrot.slane %v331, %v335
    %v337 = vlaneseq
    %v338 = vshrl.u32 %v337, 7
    %v339 = vsub.s32 1, %v338
    %v340 = vrot.slane %v331, %v339
    %v343 = vmul.f32 %v327, %v336
    %v344 = vmul.f32 %v328, %v340
    %v345 = vmul.f32 %v329, %v336
    %v346 = vmul.f32 %v330, %v340
    %v347 = vld [vmem:[%s7] sm:$0x3]
    %v349 = vlaneseq
    %v350 = vshrl.u32 %v349, 7
    %v351 = vsub.s32 0, %v350
    %v352 = vrot.slane %v347, %v351
    %v353 = vlaneseq
    %v354 = vshrl.u32 %v353, 7
    %v355 = vsub.s32 1, %v354
    %v356 = vrot.slane %v347, %v355
    %v359 = vadd.f32 %v343, %v352
    %v360 = vadd.f32 %v344, %v356
    %v361 = vadd.f32 %v345, %v352
    %v362 = vadd.f32 %v346, %v356
    %v363 = vmax.f32 %v359, 0.0
    %v364 = vmax.f32 %v360, 0.0
    %v365 = vmax.f32 %v361, 0.0
    %v366 = vmax.f32 %v362, 0.0
    %v367 = vld [vmem:[#allocation12] sm:$0xff]
    %v368 = vld [vmem:[#allocation12 + $0x8] sm:$0xff]
    %v369 = vld [vmem:[#allocation12 + $0x10] sm:$0xff]
    %v370 = vld [vmem:[#allocation12 + $0x18] sm:$0xff]
    %v371 = vld [vmem:[#allocation12 + $0x20] sm:$0xff]
    %v372 = vld [vmem:[#allocation12 + $0x28] sm:$0xff]
    %v373 = vld [vmem:[#allocation12 + $0x30] sm:$0xff]
    %v374 = vld [vmem:[#allocation12 + $0x38] sm:$0xff]
    %v375 = vld [vmem:[#allocation12 + $0x40] sm:$0xff]
    %v376 = vld [vmem:[#allocation12 + $0x48] sm:$0xff]
    %v377 = vld [vmem:[#allocation12 + $0x50] sm:$0xff]
    %v378 = vld [vmem:[#allocation12 + $0x58] sm:$0xff]
    %v379 = vld [vmem:[#allocation12 + $0x60] sm:$0xff]
    %v380 = vld [vmem:[#allocation12 + $0x68] sm:$0xff]
    %v381 = vld [vmem:[#allocation12 + $0x70] sm:$0xff]
    %v382 = vld [vmem:[#allocation12 + $0x78] sm:$0xff]
    %v383 = vld [vmem:[#allocation12 + $0x80] sm:$0xff]
    %v384 = vld [vmem:[#allocation12 + $0x88] sm:$0xff]
    %v385 = vld [vmem:[#allocation12 + $0x90] sm:$0xff]
    %v386 = vld [vmem:[#allocation12 + $0x98] sm:$0xff]
    %v387 = vld [vmem:[#allocation12 + $0xa0] sm:$0xff]
    %v388 = vld [vmem:[#allocation12 + $0xa8] sm:$0xff]
    %v389 = vld [vmem:[#allocation12 + $0xb0] sm:$0xff]
    %v390 = vld [vmem:[#allocation12 + $0xb8] sm:$0xff]
    %v391 = vld [vmem:[#allocation12 + $0xc0] sm:$0xff]
    %v392 = vld [vmem:[#allocation12 + $0xc8] sm:$0xff]
    %v393 = vld [vmem:[#allocation12 + $0xd0] sm:$0xff]
    %v394 = vld [vmem:[#allocation12 + $0xd8] sm:$0xff]
    %v395 = vld [vmem:[#allocation12 + $0xe0] sm:$0xff]
    %v396 = vld [vmem:[#allocation12 + $0xe8] sm:$0xff]
    %v397 = vld [vmem:[#allocation12 + $0xf0] sm:$0xff]
    %v398 = vld [vmem:[#allocation12 + $0xf8] sm:$0xff]
    %v399 = vld [vmem:[#allocation12 + $0x100] sm:$0xff]
    %v400 = vld [vmem:[#allocation12 + $0x108] sm:$0xff]
    %v401 = vld [vmem:[#allocation12 + $0x110] sm:$0xff]
    %v402 = vld [vmem:[#allocation12 + $0x118] sm:$0xff]
    %v403 = vld [vmem:[#allocation12 + $0x120] sm:$0xff]
    %v404 = vld [vmem:[#allocation12 + $0x128] sm:$0xff]
    %v405 = vld [vmem:[#allocation12 + $0x130] sm:$0xff]
    %v406 = vld [vmem:[#allocation12 + $0x138] sm:$0xff]
    %v407 = vld [vmem:[#allocation12 + $0x140] sm:$0xff]
    %v408 = vld [vmem:[#allocation12 + $0x148] sm:$0xff]
    %v409 = vld [vmem:[#allocation12 + $0x150] sm:$0xff]
    %v410 = vld [vmem:[#allocation12 + $0x158] sm:$0xff]
    %v411 = vld [vmem:[#allocation12 + $0x160] sm:$0xff]
    %v412 = vld [vmem:[#allocation12 + $0x168] sm:$0xff]
    %v413 = vld [vmem:[#allocation12 + $0x170] sm:$0xff]
    %v414 = vld [vmem:[#allocation12 + $0x178] sm:$0xff]
    %v415 = vld [vmem:[#allocation12 + $0x180] sm:$0xff]
    %v416 = vld [vmem:[#allocation12 + $0x188] sm:$0xff]
    %v417 = vld [vmem:[#allocation12 + $0x190] sm:$0xff]
    %v418 = vld [vmem:[#allocation12 + $0x198] sm:$0xff]
    %v419 = vld [vmem:[#allocation12 + $0x1a0] sm:$0xff]
    %v420 = vld [vmem:[#allocation12 + $0x1a8] sm:$0xff]
    %v421 = vld [vmem:[#allocation12 + $0x1b0] sm:$0xff]
    %v422 = vld [vmem:[#allocation12 + $0x1b8] sm:$0xff]
    %v423 = vld [vmem:[#allocation12 + $0x1c0] sm:$0xff]
    %v424 = vld [vmem:[#allocation12 + $0x1c8] sm:$0xff]
    %v425 = vld [vmem:[#allocation12 + $0x1d0] sm:$0xff]
    %v426 = vld [vmem:[#allocation12 + $0x1d8] sm:$0xff]
    %v427 = vld [vmem:[#allocation12 + $0x1e0] sm:$0xff]
    %v428 = vld [vmem:[#allocation12 + $0x1e8] sm:$0xff]
    %v429 = vld [vmem:[#allocation12 + $0x1f0] sm:$0xff]
    %v430 = vld [vmem:[#allocation12 + $0x1f8] sm:$0xff]
    %v431 = vld [vmem:[%s9] sm:$0x3]
    %v433 = vlaneseq
    %v434 = vshrl.u32 %v433, 7
    %v435 = vsub.s32 0, %v434
    %v436 = vrot.slane %v431, %v435
    %v437 = vlaneseq
    %v438 = vshrl.u32 %v437, 7
    %v439 = vsub.s32 1, %v438
    %v440 = vrot.slane %v431, %v439
    %443 = vmatprep.subr.mxu0 %v398
    %444 = vmatpush1.msra.mxu0 %v397
    %445 = vmatprep.subr.mxu0 %v396
    %446 = vmatpush1.msra.mxu0 %v395
    %447 = vmatprep.subr.mxu0 %v394
    %448 = vmatpush1.msra.mxu0 %v393
    %449 = vmatprep.subr.mxu0 %v392
    %450 = vmatpush1.msra.mxu0 %v391
    %451 = vmatprep.subr.mxu0 %v390
    %452 = vmatpush1.msra.mxu0 %v389
    %453 = vmatprep.subr.mxu0 %v388
    %454 = vmatpush1.msra.mxu0 %v387
    %455 = vmatprep.subr.mxu0 %v386
    %456 = vmatpush1.msra.mxu0 %v385
    %457 = vmatprep.subr.mxu0 %v384
    %458 = vmatpush1.msra.mxu0 %v383
    %459 = vmatprep.subr.mxu0 %v382
    %460 = vmatpush1.msra.mxu0 %v381
    %461 = vmatprep.subr.mxu0 %v380
    %462 = vmatpush1.msra.mxu0 %v379
    %463 = vmatprep.subr.mxu0 %v378
    %464 = vmatpush1.msra.mxu0 %v377
    %465 = vmatprep.subr.mxu0 %v376
    %466 = vmatpush1.msra.mxu0 %v375
    %467 = vmatprep.subr.mxu0 %v374
    %468 = vmatpush1.msra.mxu0 %v373
    %469 = vmatprep.subr.mxu0 %v372
    %470 = vmatpush1.msra.mxu0 %v371
    %471 = vmatprep.subr.mxu0 %v370
    %472 = vmatpush1.msra.mxu0 %v369
    %473 = vmatprep.subr.mxu0 %v368
    %474 = vmatpush1.msra.mxu0 %v367
    %475 = vmatprep.subr.mxu0 %v430
    %476 = vmatpush2.msra.mxu0 %v429
    %477 = vmatprep.subr.mxu0 %v428
    %478 = vmatpush2.msra.mxu0 %v427
    %479 = vmatprep.subr.mxu0 %v426
    %480 = vmatpush2.msra.mxu0 %v425
    %481 = vmatprep.subr.mxu0 %v424
    %482 = vmatpush2.msra.mxu0 %v423
    %483 = vmatprep.subr.mxu0 %v422
    %484 = vmatpush2.msra.mxu0 %v421
    %485 = vmatprep.subr.mxu0 %v420
    %486 = vmatpush2.msra.mxu0 %v419
    %487 = vmatprep.subr.mxu0 %v418
    %488 = vmatpush2.msra.mxu0 %v417
    %489 = vmatprep.subr.mxu0 %v416
    %490 = vmatpush2.msra.mxu0 %v415
    %491 = vmatprep.subr.mxu0 %v414
    %492 = vmatpush2.msra.mxu0 %v413
    %493 = vmatprep.subr.mxu0 %v412
    %494 = vmatpush2.msra.mxu0 %v411
    %495 = vmatprep.subr.mxu0 %v410
    %496 = vmatpush2.msra.mxu0 %v409
    %497 = vmatprep.subr.mxu0 %v408
    %498 = vmatpush2.msra.mxu0 %v407
    %499 = vmatprep.subr.mxu0 %v406
    %500 = vmatpush2.msra.mxu0 %v405
    %501 = vmatprep.subr.mxu0 %v404
    %502 = vmatpush2.msra.mxu0 %v403
    %503 = vmatprep.subr.mxu0 %v402
    %504 = vmatpush2.msra.mxu0 %v401
    %505 = vmatprep.subr.mxu0 %v400
    %506 = vmatpush2.msra.mxu0 %v399
    %507 = vmatprep.mubr.f32.mxu0 %v364
    %508 = vmatmul.mubr.f32.gmra.mxu0 %v363
    %v509 = vpop.f32.mrf.mxu0
    %v510 = vadd.f32 %v436, %v509
    %v511 = vpop.f32.mrf.mxu0
    %v512 = vadd.f32 %v440, %v511
    %513 = vmatprep.mubr.f32.mxu0 %v366
    %514 = vmatmul.mubr.f32.gmra.mxu0 %v365
    %v515 = vpop.f32.mrf.mxu0
    %v516 = vadd.f32 %v436, %v515
    %v517 = vpop.f32.mrf.mxu0
    %v518 = vadd.f32 %v440, %v517
    %519 = vdwg.mxu0
    %520 = vst [vmem:[#allocation13] sm:$0xff] %v510
    %521 = vst [vmem:[#allocation13 + $0x8] sm:$0xff] %v512
    %522 = vst [vmem:[#allocation13 + $0x10] sm:$0xff] %v516
    %523 = vst [vmem:[#allocation13 + $0x18] sm:$0xff] %v518
    // Predicated region
    $region58: #{tpu_custom_call.1} parent=1 // pred_check
      _
    $region59: #{tpu_custom_call.1} parent=1 // pred_check_branch
      %525 = sbr.rel (0) target = $region61
    $region60: #{tpu_custom_call.1} parent=1 // pred_region
      %s527 = ssub.s32 512, 512
      %528 = vsyncadd [#allocation6], %s527
      %s529 = sshll.u32 [#allocation13], 4
      %s530 = int_to_ptr.vmem [resolvable:$true] %s529
      %535 = dma.vmem_to_hbm [thread:$0]  %s530, 512, %s10, [#allocation6], 256, 256, 16
    $region61: #{tpu_custom_call.1} parent=1 // pred_fallthru
      _
    // Predicated region
    $region62: #{tpu_custom_call.1} parent=1 // pred_check
      _
    $region63: #{tpu_custom_call.1} parent=1 // pred_check_branch
      %537 = sbr.rel (0) target = $region65
    $region64: #{tpu_custom_call.1} parent=1 // pred_region
      %538 = dma.done [#allocation6], 512
    $region65: #{tpu_custom_call.1} parent=1 // pred_fallthru
      _
    %539 = vsyncpa [#allocation5], 1
    %540 = vsyncpa [#allocation8], 1
    %541 = vsyncpa [#allocation11], 1
    %542 = vsyncpa [#allocation6], 1

</llo_original>
